<compile_context>
chip_gen: v7x
topology: tpu7x:2x2x1
jax: 0.10.0
libtpu: 0.0.40
codegen_flags: <defaults>
</compile_context>

<pallas_src>
import math
import numpy as np

import jax
import jax.numpy as jnp
from jax import lax
from jax.experimental import pallas as pl
from jax.experimental.pallas import tpu as pltpu


NEG_SLOPE = 0.1  # HiFiGAN default: LeakyReLU(negative_slope=0.1)


def _pick_time_tile(t_out):
    """Largest sublane-friendly time tile that divides t_out exactly."""
    for tt in (256, 128):
        if t_out % tt == 0:
            return tt
    return t_out


# ----------------------------------------------------------------------------
# Pallas kernel: dense (block-diagonal-expanded) grouped/strided Conv1d + bias
# [+ LeakyReLU] for one (batch, time-tile) block, time-major layout.
# ----------------------------------------------------------------------------
def _make_conv_kernel(K, S, cin, cout, TT, act, neg_slope):
    def kernel(x_ref, w_ref, b_ref, o_ref):
        # x_ref: (L, S*cin)   full-time polyphase input, resident across time tiles
        # w_ref: (K, cin, cout) dense per-tap weights (block-diag for grouped conv)
        # b_ref: (1, cout)
        # o_ref: (TT, cout)   output tile (time on sublanes, channels on lanes)
        t0 = pl.program_id(1) * TT
        acc = None
        for k in range(K):                     # static unroll: K full-width matmuls
            p, q = k % S, k // S
            xk = x_ref[pl.ds(t0 + q, TT), pl.ds(p * cin, cin)]     # (TT, cin)
            d = jnp.dot(xk, w_ref[k], preferred_element_type=jnp.float32)
            acc = d if acc is None else acc + d
        acc = acc + b_ref[...]
        if act:
            acc = jnp.where(acc >= 0, acc, neg_slope * acc)        # LeakyReLU
        o_ref[...] = acc.astype(o_ref.dtype)

    return kernel


# ----------------------------------------------------------------------------
# Wrapper: PyTorch-semantics Conv1d(groups, stride, zero padding) [+ LeakyReLU]
# in time-major (B, T, C) layout.
# ----------------------------------------------------------------------------
def conv1d_pallas_tc(x_tc, w, b, *, stride, pad, groups, act, neg_slope=NEG_SLOPE):
    B, T, cin = x_tc.shape
    cout, cin_g, K = w.shape
    G = groups
    assert cin == cin_g * G and cout % G == 0
    S = stride
    t_out = (T + 2 * pad - K) // S + 1

    if cin == 1 and S == 1 and K > 1:
        # First layer: im2col the K taps into the channel axis -> one matmul/tile.
        xp = jnp.pad(x_tc, ((0, 0), (pad, pad), (0, 0)))
        x_poly = jnp.concatenate([xp[:, k:k + t_out, :] for k in range(K)], axis=2)
        w_dense = jnp.transpose(w[:, 0, :])[None]          # (1, K, cout)
        K_eff, S_eff, cin_eff, L = 1, 1, K, t_out
    else:
        xp = jnp.pad(x_tc, ((0, 0), (pad, pad), (0, 0)))   # zero padding (PyTorch)
        t_pad = T + 2 * pad
        L = -(-t_pad // S)                                  # ceil(t_pad / S)
        extra = S * L - t_pad
        if extra:
            xp = jnp.pad(xp, ((0, 0), (0, extra), (0, 0)))
        # polyphase, transpose-free: x_poly[b, q, p*cin + ci] = xp[b, q*S + p, ci]
        x_poly = xp.reshape(B, L, S * cin)
        # expand grouped weight to dense block-diagonal (K, cin, cout)
        w_g = w.reshape(G, cout // G, cin_g, K)
        eye = jnp.eye(G, dtype=w.dtype)
        w_dense = jnp.einsum('gock,gh->khcgo', w_g, eye).reshape(K, cin, cout)
        K_eff, S_eff, cin_eff = K, S, cin

    b_r = b.reshape(1, cout)
    TT = _pick_time_tile(t_out)
    grid = (B, t_out // TT)
    kernel = _make_conv_kernel(K_eff, S_eff, cin_eff, cout, TT, act, neg_slope)

    out = pl.pallas_call(
        kernel,
        out_shape=jax.ShapeDtypeStruct((B, t_out, cout), jnp.float32),
        grid=grid,
        in_specs=[
            # full time axis per batch element; index constant over time tiles
            # -> fetched once per batch element, VMEM-resident.
            pl.BlockSpec((None, L, S_eff * cin_eff), lambda bb, tt: (bb, 0, 0)),
            # weights / bias: constant index -> fetched once, resident.
            pl.BlockSpec((K_eff, cin_eff, cout), lambda bb, tt: (0, 0, 0)),
            pl.BlockSpec((1, cout), lambda bb, tt: (0, 0)),
        ],
        out_specs=pl.BlockSpec((None, TT, cout), lambda bb, tt: (bb, tt, 0)),
        compiler_params=pltpu.CompilerParams(
            dimension_semantics=("parallel", "parallel")),
    )(x_poly, w_dense, b_r)
    return out


# ----------------------------------------------------------------------------
# Pure-JAX reference (PyTorch semantics, NCW layout) for correctness check.
# ----------------------------------------------------------------------------
def conv1d_ref(x, w, b, *, stride, pad, groups, act, neg_slope=NEG_SLOPE):
    xp = jnp.pad(x, ((0, 0), (0, 0), (pad, pad))) if pad > 0 else x
    y = lax.conv_general_dilated(
        xp, w, window_strides=(stride,), padding="VALID",
        dimension_numbers=("NCH", "OIH", "NCH"),
        feature_group_count=groups, precision=lax.Precision.HIGHEST)
    y = y + b[None, :, None]
    if act:
        y = jnp.where(y >= 0, y, neg_slope * y)
    return y


# ----------------------------------------------------------------------------
# HiFiGANScaleDiscriminator: layer configs, parameters, forward.
# ----------------------------------------------------------------------------
def build_layer_cfgs(in_channels, out_channels, kernel_sizes, channels,
                     max_downsample_channels, max_groups, downsample_scales):
    assert len(kernel_sizes) == 4
    for ks in kernel_sizes:
        assert ks % 2 == 1
    cfgs = [dict(cin=in_channels, cout=channels, K=kernel_sizes[0], stride=1,
                 pad=(kernel_sizes[0] - 1) // 2, groups=1, act=True)]
    in_chs, out_chs, groups = channels, channels, 4
    for ds in downsample_scales:
        cfgs.append(dict(cin=in_chs, cout=out_chs, K=kernel_sizes[1], stride=ds,
                         pad=(kernel_sizes[1] - 1) // 2, groups=groups, act=True))
        in_chs = out_chs
        out_chs = min(in_chs * 2, max_downsample_channels)
        groups = min(groups * 4, max_groups)
    out_chs = min(in_chs * 2, max_downsample_channels)
    cfgs.append(dict(cin=in_chs, cout=out_chs, K=kernel_sizes[2], stride=1,
                     pad=(kernel_sizes[2] - 1) // 2, groups=1, act=True))
    cfgs.append(dict(cin=out_chs, cout=out_channels, K=kernel_sizes[3], stride=1,
                     pad=(kernel_sizes[3] - 1) // 2, groups=1, act=False))
    return cfgs


def hifigan_scale_disc_forward(params, cfgs, x, *, use_pallas=True,
                               return_fmaps=False):
    """x: (B, in_channels, T) NCW -> out: (B, out_channels, t_out) NCW."""
    fmaps = []
    if use_pallas:
        h = jnp.transpose(x, (0, 2, 1))            # internal time-major layout
        for (w, b), cfg in zip(params, cfgs):
            h = conv1d_pallas_tc(h, w, b, stride=cfg["stride"], pad=cfg["pad"],
                                 groups=cfg["groups"], act=cfg["act"])
            fmaps.append(h)
        out = jnp.transpose(h, (0, 2, 1))
        if return_fmaps:
            return out, [jnp.transpose(f, (0, 2, 1)) for f in fmaps[:-1]]
        return out
    else:
        h = x
        for (w, b), cfg in zip(params, cfgs):
            h = conv1d_ref(h, w, b, stride=cfg["stride"], pad=cfg["pad"],
                           groups=cfg["groups"], act=cfg["act"])
            fmaps.append(h)
        out = h
        if return_fmaps:
            return out, fmaps[:-1]
        return out


if __name__ == "__main__":
    # Small but structurally faithful configuration of HiFiGANScaleDiscriminator
    # (defaults: channels=128, max_downsample_channels=1024 — reduced here).
    in_channels, out_channels = 1, 1
    kernel_sizes = [15, 41, 5, 3]
    channels = 16
    max_downsample_channels = 64
    max_groups = 16
    downsample_scales = [2, 2, 4, 4, 1]
    B, T = 2, 1024

    cfgs = build_layer_cfgs(in_channels, out_channels, kernel_sizes, channels,
                            max_downsample_channels, max_groups, downsample_scales)

    # Deterministic PyTorch-like Conv1d init: U(-1/sqrt(fan_in), 1/sqrt(fan_in)).
    key = jax.random.PRNGKey(0)
    params = []
    for cfg in cfgs:
        key, kw, kb = jax.random.split(key, 3)
        cin_g = cfg["cin"] // cfg["groups"]
        bound = 1.0 / math.sqrt(cin_g * cfg["K"])
        w = jax.random.uniform(kw, (cfg["cout"], cin_g, cfg["K"]),
                               jnp.float32, -bound, bound)
        bias = jax.random.uniform(kb, (cfg["cout"],), jnp.float32, -bound, bound)
        params.append((w, bias))

    key, kx = jax.random.split(key)
    x = jax.random.normal(kx, (B, in_channels, T), jnp.float32)

    out, fmaps = hifigan_scale_disc_forward(params, cfgs, x,
                                            use_pallas=True, return_fmaps=True)
    out, fmaps = jax.block_until_ready((out, fmaps))

    out_ref, fmaps_ref = hifigan_scale_disc_forward(params, cfgs, x,
                                                    use_pallas=False,
                                                    return_fmaps=True)
    out_ref, fmaps_ref = jax.block_until_ready((out_ref, fmaps_ref))

    # Tolerance covers possible default (multi-pass bf16) MXU precision of the
    # in-kernel f32 matmuls vs. the HIGHEST-precision XLA reference.
    for li, (a, r) in enumerate(zip(fmaps + [out], fmaps_ref + [out_ref])):
        np.testing.assert_allclose(np.asarray(a), np.asarray(r),
                                   rtol=2e-2, atol=2e-3,
                                   err_msg=f"mismatch at layer {li}")

    print("KERNEL_OK")
</pallas_src>

<mosaic_0001>
module attributes {stable_mosaic.version = 11 : i64} {
  func.func @kernel(%arg0: i32, %arg1: i32, %arg2: memref<1x1024x15xf32, #tpu.memory_space<vmem>>, %arg3: memref<1x15x16xf32, #tpu.memory_space<vmem>>, %arg4: memref<1x16xf32, #tpu.memory_space<vmem>>, %arg5: memref<1x256x16xf32, #tpu.memory_space<vmem>>) attributes {dimension_semantics = [#tpu.dimension_semantics<parallel>, #tpu.dimension_semantics<parallel>], iteration_bounds = array<i64: 2, 4>, scalar_prefetch = 0 : i64, scratch_operands = 0 : i64, tpu.core_type = #tpu.core_type<tc>, window_params = [{transform_indices = @transform_0, window_bounds = array<i64: 1, 1024, 15>}, {pipeline_mode = #tpu.pipeline_mode<synchronous>, transform_indices = @transform_1, window_bounds = array<i64: 1, 15, 16>}, {pipeline_mode = #tpu.pipeline_mode<synchronous>, transform_indices = @transform_2, window_bounds = array<i64: 1, 16>}, {transform_indices = @transform_3, window_bounds = array<i64: 1, 256, 16>}]} {
    %c256_i32 = arith.constant 256 : i32
    %0 = arith.muli %arg1, %c256_i32 : i32
    %c0_i32 = arith.constant 0 : i32
    %1 = arith.addi %0, %c0_i32 : i32
    %c0 = arith.constant 0 : index
    %2 = arith.index_cast %1 : i32 to index
    %c0_0 = arith.constant 0 : index
    %3 = vector.load %arg2[%c0, %2, %c0_0] : memref<1x1024x15xf32, #tpu.memory_space<vmem>>, vector<1x256x15xf32>
    %4 = vector.shape_cast %3 : vector<1x256x15xf32> to vector<256x15xf32>
    %c0_1 = arith.constant 0 : index
    %c0_2 = arith.constant 0 : index
    %c0_3 = arith.constant 0 : index
    %5 = vector.load %arg3[%c0_1, %c0_2, %c0_3] : memref<1x15x16xf32, #tpu.memory_space<vmem>>, vector<1x15x16xf32>
    %6 = vector.shape_cast %5 : vector<1x15x16xf32> to vector<15x16xf32>
    %cst = arith.constant dense<0.000000e+00> : vector<256x16xf32>
    %7 = tpu.matmul %4, %6, %cst {dimension_numbers = #tpu.dot_dimension_numbers<[1], [0], [0], [1], [0, 0, 1, 1], [], []>} : vector<256x15xf32>, vector<15x16xf32>, vector<256x16xf32> -> vector<256x16xf32>
    %c0_4 = arith.constant 0 : index
    %c0_5 = arith.constant 0 : index
    %8 = vector.load %arg4[%c0_4, %c0_5] : memref<1x16xf32, #tpu.memory_space<vmem>>, vector<1x16xf32>
    %9 = vector.broadcast %8 : vector<1x16xf32> to vector<256x16xf32>
    %10 = arith.addf %7, %9 : vector<256x16xf32>
    %cst_6 = arith.constant 0.000000e+00 : f32
    %11 = vector.broadcast %cst_6 : f32 to vector<256x16xf32>
    %12 = arith.cmpf oge, %10, %11 : vector<256x16xf32>
    %cst_7 = arith.constant 1.000000e-01 : f32
    %13 = vector.broadcast %cst_7 : f32 to vector<256x16xf32>
    %14 = arith.mulf %13, %10 : vector<256x16xf32>
    %15 = arith.select %12, %10, %14 : vector<256x16xi1>, vector<256x16xf32>
    %c0_8 = arith.constant 0 : index
    %c0_9 = arith.constant 0 : index
    %c0_10 = arith.constant 0 : index
    %16 = vector.load %arg5[%c0_8, %c0_9, %c0_10] : memref<1x256x16xf32, #tpu.memory_space<vmem>>, vector<1x256x16xf32>
    %17 = vector.shape_cast %16 : vector<1x256x16xf32> to vector<256x16xf32>
    %18 = vector.shape_cast %15 : vector<256x16xf32> to vector<1x256x16xf32>
    tpu.vector_store %arg5[%c0_8, %c0_9, %c0_10], %18 {strides = array<i32>} : memref<1x256x16xf32, #tpu.memory_space<vmem>>, vector<1x256x16xf32>,
    return
  }
  func.func @transform_0(%arg0: i32, %arg1: i32) -> (i32, i32, i32) {
    %c0_i32 = arith.constant 0 : i32
    %c0_i32_0 = arith.constant 0 : i32
    %c0_i32_1 = arith.constant 0 : i32
    return %arg0, %c0_i32, %c0_i32_0 : i32, i32, i32
  }
  func.func @transform_1(%arg0: i32, %arg1: i32) -> (i32, i32, i32) {
    %c0_i32 = arith.constant 0 : i32
    %c0_i32_0 = arith.constant 0 : i32
    %c0_i32_1 = arith.constant 0 : i32
    %c0_i32_2 = arith.constant 0 : i32
    return %c0_i32, %c0_i32_0, %c0_i32_1 : i32, i32, i32
  }
  func.func @transform_2(%arg0: i32, %arg1: i32) -> (i32, i32) {
    %c0_i32 = arith.constant 0 : i32
    %c0_i32_0 = arith.constant 0 : i32
    %c0_i32_1 = arith.constant 0 : i32
    return %c0_i32, %c0_i32_0 : i32, i32
  }
  func.func @transform_3(%arg0: i32, %arg1: i32) -> (i32, i32, i32) {
    %c0_i32 = arith.constant 0 : i32
    %c0_i32_0 = arith.constant 0 : i32
    return %arg0, %arg1, %c0_i32 : i32, i32, i32
  }
}

</mosaic_0001>

<llo_original>
// kernel: tpu_custom_call.1
$region0: #{tpu_custom_call.1}
  #allocation0 [shape = 'u32[]', space=smem, size = 0x4, offset = 0x4, fixed_abs, tag = 'smem constant byte address 0x4 - core index']
  #allocation1 [shape = 'u32[144,128]{1,0:T(1,128)}', space=vmem, size = 0x12000, scoped, tag = 'internal scratch']
  %s0 = inlined_call_operand.vmem [shape: f32[2,1024,15], index: 0, kind: input, shape index: {}]
  %s1 = inlined_call_operand.vmem [shape: f32[1,15,16], index: 1, kind: input, shape index: {}]
  %s2 = inlined_call_operand.vmem [shape: f32[1,16], index: 2, kind: input, shape index: {}]
  %s3 = inlined_call_operand.vmem [shape: f32[2,1024,16], index: 3, kind: output, shape index: {}]
  %s4 = sld [smem:[#allocation0]]
  $region45: #{tpu_custom_call.1} parent=0
    _
  %s6 = ssub.s32 1, %s4
  %s7 = scalar_select 0, %s6, %s4
  loop: start=0, step=1, limit=10
  $region2: #{tpu_custom_call.1} parent=0 // loop_pre_header
    _
  $region3: #{tpu_custom_call.1} parent=0 // loop_header
    %s9 = sphi 0, %s13
    %p10 = scmp.ge.s32.totalorder %s9, 10
    %s16 = sphi 0, %s28
    %s17 = sphi 0, %s24
    %s18 = sphi 0, %s16
    %s19 = sphi 0, %s17
    %s20 = sphi 0, %s18
    %s21 = sphi 0, %s19
    %s31 = sphi 0, %s33
    %s34 = sphi 0, %s31
    %s35 = sphi 0, %s34
    %s51 = sphi 0, %s35
    %s55 = sphi 0, %s55
    %s57 = sphi 0, %s55
    %s58 = sphi 0, %s57
    %s72 = sphi 0, %s58
    %s76 = sphi 0, %s76
    %s78 = sphi 0, %s76
    %s79 = sphi 0, %s78
    %s93 = sphi 0, %s79
    %s101 = sphi 0, %s103
    %s104 = sphi 0, %s101
    %s105 = sphi 0, %s104
    %s121 = sphi 0, %s105
  $region4: #{tpu_custom_call.1} parent=0 // loop_header_branch
    %12 = sbr.rel (%p10) target = $region8
  $region5: #{tpu_custom_call.1} parent=0 // loop_body
    %s14 = ssub.s32 %s9, 1
    %s15 = ssub.s32 %s9, 2
    %s22 = sadd.s32 1, %s17
    %p23 = scmp.ge.s32.totalorder %s22, 4
    %s24 = scalar_select %p23, 0, %s22
    %s25 = sadd.s32 1, %s16
    %s26 = scalar_select %p23, %s25, %s16
    %p27 = scmp.ge.s32.totalorder %s26, 2
    %s28 = scalar_select %p27, 0, %s26
    %s29 = ssub.s32 %s16, %s28
    %p30 = scmp.eq.s32.totalorder %s29, 0
    %s32 = sadd.s32 %s31, 1
    %s33 = scalar_select %p30, %s31, %s32
    %p36 = pneg %p30
    %p37 = scmp.eq.s32.totalorder %s9, 7
    %p38 = por %p36, %p37
    %p39 = scmp.ne.s32.totalorder %s31, %s34
    %p40 = scmp.eq.s32.totalorder %s9, 0
    %p41 = por %p39, %p40
    %p42 = scmp.ne.s32.totalorder %s31, %s34
    %p43 = scmp.eq.s32.totalorder %s14, 7
    %p44 = por %p42, %p43
    %p45 = scmp.ne.s32.totalorder %s34, %s35
    %p46 = scmp.eq.s32.totalorder %s14, 0
    %p47 = por %p45, %p46
    %p48 = scmp.ne.s32.totalorder %s34, %s35
    %p49 = scmp.eq.s32.totalorder %s15, 7
    %p50 = por %p48, %p49
    %p52 = scmp.ne.s32.totalorder %s35, %s51
    %p53 = scmp.eq.s32.totalorder %s15, 0
    %p54 = por %p52, %p53
    %s56 = sadd.s32 %s55, 1
    %p59 = scmp.eq.s32.totalorder %s9, 7
    %p60 = scmp.ne.s32.totalorder %s55, %s57
    %p61 = scmp.eq.s32.totalorder %s9, 0
    %p62 = por %p60, %p61
    %p63 = scmp.ne.s32.totalorder %s55, %s57
    %p64 = scmp.eq.s32.totalorder %s14, 7
    %p65 = por %p63, %p64
    %p66 = scmp.ne.s32.totalorder %s57, %s58
    %p67 = scmp.eq.s32.totalorder %s14, 0
    %p68 = por %p66, %p67
    %p69 = scmp.ne.s32.totalorder %s57, %s58
    %p70 = scmp.eq.s32.totalorder %s15, 7
    %p71 = por %p69, %p70
    %p73 = scmp.ne.s32.totalorder %s58, %s72
    %p74 = scmp.eq.s32.totalorder %s15, 0
    %p75 = por %p73, %p74
    %s77 = sadd.s32 %s76, 1
    %p80 = scmp.eq.s32.totalorder %s9, 7
    %p81 = scmp.ne.s32.totalorder %s76, %s78
    %p82 = scmp.eq.s32.totalorder %s9, 0
    %p83 = por %p81, %p82
    %p84 = scmp.ne.s32.totalorder %s76, %s78
    %p85 = scmp.eq.s32.totalorder %s14, 7
    %p86 = por %p84, %p85
    %p87 = scmp.ne.s32.totalorder %s78, %s79
    %p88 = scmp.eq.s32.totalorder %s14, 0
    %p89 = por %p87, %p88
    %p90 = scmp.ne.s32.totalorder %s78, %s79
    %p91 = scmp.eq.s32.totalorder %s15, 7
    %p92 = por %p90, %p91
    %p94 = scmp.ne.s32.totalorder %s79, %s93
    %p95 = scmp.eq.s32.totalorder %s15, 0
    %p96 = por %p94, %p95
    %s97 = ssub.s32 %s16, %s28
    %s98 = ssub.s32 %s17, %s24
    %s99 = sor.u32 %s97, %s98
    %p100 = scmp.eq.s32.totalorder %s99, 0
    %s102 = sadd.s32 %s101, 1
    %s103 = scalar_select %p100, %s101, %s102
    %p106 = pneg %p100
    %p107 = scmp.eq.s32.totalorder %s9, 7
    %p108 = por %p106, %p107
    %p109 = scmp.ne.s32.totalorder %s101, %s104
    %p110 = scmp.eq.s32.totalorder %s9, 0
    %p111 = por %p109, %p110
    %p112 = scmp.ne.s32.totalorder %s101, %s104
    %p113 = scmp.eq.s32.totalorder %s14, 7
    %p114 = por %p112, %p113
    %p115 = scmp.ne.s32.totalorder %s104, %s105
    %p116 = scmp.eq.s32.totalorder %s14, 0
    %p117 = por %p115, %p116
    %p118 = scmp.ne.s32.totalorder %s104, %s105
    %p119 = scmp.eq.s32.totalorder %s15, 7
    %p120 = por %p118, %p119
    %p122 = scmp.ne.s32.totalorder %s105, %s121
    %p123 = scmp.eq.s32.totalorder %s15, 0
    %p124 = por %p122, %p123
    %p125 = scmp.le.s32.totalorder 1, %s9
    %p126 = scmp.lt.s32.totalorder %s9, 9
    %p127 = pnand %p125, %p126
    %p128 = pneg %p127
    // Predicated region
    $region9: #{tpu_custom_call.1} parent=5 // pred_check
      _
    $region10: #{tpu_custom_call.1} parent=5 // pred_check_branch
      %130 = sbr.rel (%p127) target = $region12
    $region11: #{tpu_custom_call.1} parent=5 // pred_region
      %s131 = ssub.s32 %s9, 1
      // Predicated region
      $region13: #{tpu_custom_call.1} parent=11 // pred_check
        %p132 = pneg %p68
      $region14: #{tpu_custom_call.1} parent=11 // pred_check_branch
        %134 = sbr.rel (%p132) target = $region16
      $region15: #{tpu_custom_call.1} parent=11 // pred_region
        _
      $region16: #{tpu_custom_call.1} parent=11 // pred_fallthru
        _
      // Predicated region
      $region17: #{tpu_custom_call.1} parent=11 // pred_check
        %p135 = pneg %p89
      $region18: #{tpu_custom_call.1} parent=11 // pred_check_branch
        %137 = sbr.rel (%p135) target = $region20
      $region19: #{tpu_custom_call.1} parent=11 // pred_region
        _
      $region20: #{tpu_custom_call.1} parent=11 // pred_fallthru
        _
    $region12: #{tpu_custom_call.1} parent=5 // pred_fallthru
      _
    %p138 = scmp.lt.s32.totalorder %s9, 8
    // Predicated region
    $region21: #{tpu_custom_call.1} parent=5 // pred_check
      %p139 = pneg %p138
    $region22: #{tpu_custom_call.1} parent=5 // pred_check_branch
      %141 = sbr.rel (%p139) target = $region24
    $region23: #{tpu_custom_call.1} parent=5 // pred_region
      // Predicated region
      $region25: #{tpu_custom_call.1} parent=23 // pred_check
        %p142 = pneg %p41
      $region26: #{tpu_custom_call.1} parent=23 // pred_check_branch
        %144 = sbr.rel (%p142) target = $region28
      $region27: #{tpu_custom_call.1} parent=23 // pred_region
        %p145 = scmp.lt.s32.totalorder %s16, 1
        %s146 = scalar_select %p145, %s16, 1
        %s147 = smul.addr %s146, 128
        %s148 = smul.addr %s147, 8
        %s149 = scalar_lea.vmem %s0, %s148
      $region28: #{tpu_custom_call.1} parent=23 // pred_fallthru
        _
    $region24: #{tpu_custom_call.1} parent=5 // pred_fallthru
      _
    %p150 = scmp.le.s32.totalorder 1, %s9
    %p151 = scmp.lt.s32.totalorder %s9, 9
    %p152 = pnand %p150, %p151
    %p153 = pneg %p152
    // Predicated region
    $region29: #{tpu_custom_call.1} parent=5 // pred_check
      _
    $region30: #{tpu_custom_call.1} parent=5 // pred_check_branch
      %155 = sbr.rel (%p152) target = $region32
    $region31: #{tpu_custom_call.1} parent=5 // pred_region
      %s156 = ssub.s32 %s9, 1
      %p157 = scmp.lt.s32.totalorder %s18, 1
      %s158 = scalar_select %p157, %s18, 1
      %s159 = smul.addr %s158, 128
      %s160 = smul.addr %s159, 8
      %s161 = scalar_lea.vmem %s0, %s160
      %p162 = pneg %p47
      %p163 = pneg %p44
      %p164 = pneg %p68
      %p165 = pneg %p65
      %p166 = pneg %p89
      %p167 = pneg %p86
      %p168 = pneg %p117
      %p169 = pneg %p114
      %s170 = smul.u32 32, %s19
      %p171 = scmp.lt.s32.totalorder %s18, 1
      %s172 = scalar_select %p171, %s18, 1
      %p173 = scmp.lt.s32.totalorder %s170, 127
      %s174 = scalar_select %p173, %s170, 127
      %s175 = smul.addr %s172, 128
      %s176 = sadd.s32 %s174, %s175
      %s177 = smul.addr %s176, 8
      %s178 = scalar_lea.vmem %s3, %s177
      %p179 = scmp.lt.s32.totalorder %s18, 1
      %s180 = scalar_select %p179, %s18, 1
      %s181 = smul.addr %s180, 128
      %s182 = smul.addr %s181, 8
      %s183 = scalar_lea.vmem %s0, %s182
      %s184 = smul.u32 32, %s19
      %p185 = scmp.lt.s32.totalorder %s18, 1
      %s186 = scalar_select %p185, %s18, 1
      %p187 = scmp.lt.s32.totalorder %s184, 127
      %s188 = scalar_select %p187, %s184, 127
      %s189 = smul.addr %s186, 128
      %s190 = sadd.s32 %s188, %s189
      %s191 = smul.addr %s190, 8
      %s192 = scalar_lea.vmem %s3, %s191
      %s193 = smul.u32 32, %s19
      %s194 = smul.u32 %s19, 256
      %s195 = scalar_lea.vmem %s183, %s194
      %v196 = vld [vmem:[%s195] sm:$0xff]
      %v197 = vld [vmem:[%s195 + $0x8] sm:$0xff]
      %v198 = vld [vmem:[%s195 + $0x10] sm:$0xff]
      %v199 = vld [vmem:[%s195 + $0x18] sm:$0xff]
      %v200 = vld [vmem:[%s195 + $0x20] sm:$0xff]
      %v201 = vld [vmem:[%s195 + $0x28] sm:$0xff]
      %v202 = vld [vmem:[%s195 + $0x30] sm:$0xff]
      %v203 = vld [vmem:[%s195 + $0x38] sm:$0xff]
      %v204 = vld [vmem:[%s195 + $0x40] sm:$0xff]
      %v205 = vld [vmem:[%s195 + $0x48] sm:$0xff]
      %v206 = vld [vmem:[%s195 + $0x50] sm:$0xff]
      %v207 = vld [vmem:[%s195 + $0x58] sm:$0xff]
      %v208 = vld [vmem:[%s195 + $0x60] sm:$0xff]
      %v209 = vld [vmem:[%s195 + $0x68] sm:$0xff]
      %v210 = vld [vmem:[%s195 + $0x70] sm:$0xff]
      %v211 = vld [vmem:[%s195 + $0x78] sm:$0xff]
      %v212 = vld [vmem:[%s195 + $0x80] sm:$0xff]
      %v213 = vld [vmem:[%s195 + $0x88] sm:$0xff]
      %v214 = vld [vmem:[%s195 + $0x90] sm:$0xff]
      %v215 = vld [vmem:[%s195 + $0x98] sm:$0xff]
      %v216 = vld [vmem:[%s195 + $0xa0] sm:$0xff]
      %v217 = vld [vmem:[%s195 + $0xa8] sm:$0xff]
      %v218 = vld [vmem:[%s195 + $0xb0] sm:$0xff]
      %v219 = vld [vmem:[%s195 + $0xb8] sm:$0xff]
      %v220 = vld [vmem:[%s195 + $0xc0] sm:$0xff]
      %v221 = vld [vmem:[%s195 + $0xc8] sm:$0xff]
      %v222 = vld [vmem:[%s195 + $0xd0] sm:$0xff]
      %v223 = vld [vmem:[%s195 + $0xd8] sm:$0xff]
      %v224 = vld [vmem:[%s195 + $0xe0] sm:$0xff]
      %v225 = vld [vmem:[%s195 + $0xe8] sm:$0xff]
      %v226 = vld [vmem:[%s195 + $0xf0] sm:$0xff]
      %v227 = vld [vmem:[%s195 + $0xf8] sm:$0xff]
      %v228 = vld [vmem:[%s1] sm:$0xff]
      %v229 = vld [vmem:[%s1 + $0x8] sm:$0x7f]
      %v230 = vld [vmem:[%s2] sm:$0x1]
      %v232 = vlaneseq
      %v233 = vshrl.u32 %v232, 7
      %v234 = vsub.s32 0, %v233
      %v235 = vrot.slane %v230, %v234
      %vm237 = vcmask 121856
      %v239 = vsel %vm237, %v196, 0
      %v242 = vsel %vm237, %v197, 0
      %v245 = vsel %vm237, %v198, 0
      %v248 = vsel %vm237, %v199, 0
      %v251 = vsel %vm237, %v200, 0
      %v254 = vsel %vm237, %v201, 0
      %v257 = vsel %vm237, %v202, 0
      %v260 = vsel %vm237, %v203, 0
      %v263 = vsel %vm237, %v204, 0
      %v266 = vsel %vm237, %v205, 0
      %v269 = vsel %vm237, %v206, 0
      %v272 = vsel %vm237, %v207, 0
      %v275 = vsel %vm237, %v208, 0
      %v278 = vsel %vm237, %v209, 0
      %v281 = vsel %vm237, %v210, 0
      %v284 = vsel %vm237, %v211, 0
      %v287 = vsel %vm237, %v212, 0
      %v290 = vsel %vm237, %v213, 0
      %v293 = vsel %vm237, %v214, 0
      %v296 = vsel %vm237, %v215, 0
      %v299 = vsel %vm237, %v216, 0
      %v302 = vsel %vm237, %v217, 0
      %v305 = vsel %vm237, %v218, 0
      %v308 = vsel %vm237, %v219, 0
      %v311 = vsel %vm237, %v220, 0
      %v314 = vsel %vm237, %v221, 0
      %v317 = vsel %vm237, %v222, 0
      %v320 = vsel %vm237, %v223, 0
      %v323 = vsel %vm237, %v224, 0
      %v326 = vsel %vm237, %v225, 0
      %v329 = vsel %vm237, %v226, 0
      %v332 = vsel %vm237, %v227, 0
      %vm334 = vcmask 1046528
      %v336 = vsel %vm334, %v229, 0
      %338 = vmatprep.subr.mxu0 0.0
      %339 = vmatpush1.msra.mxu0 %v228
      %340 = vmatprep.subr.mxu0 0.0
      %341 = vmatpush1.msra.mxu0 %v336
      %342 = vmatprep.subr.mxu0 0.0
      %343 = vmatpush1.msra.mxu0 0.0
      %344 = vmatprep.subr.mxu0 0.0
      %345 = vmatpush1.msra.mxu0 0.0
      %346 = vmatprep.subr.mxu0 0.0
      %347 = vmatpush1.msra.mxu0 0.0
      %348 = vmatprep.subr.mxu0 0.0
      %349 = vmatpush1.msra.mxu0 0.0
      %350 = vmatprep.subr.mxu0 0.0
      %351 = vmatpush1.msra.mxu0 0.0
      %352 = vmatprep.subr.mxu0 0.0
      %353 = vmatpush1.msra.mxu0 0.0
      %354 = vmatprep.subr.mxu0 0.0
      %355 = vmatpush1.msra.mxu0 0.0
      %356 = vmatprep.subr.mxu0 0.0
      %357 = vmatpush1.msra.mxu0 0.0
      %358 = vmatprep.subr.mxu0 0.0
      %359 = vmatpush1.msra.mxu0 0.0
      %360 = vmatprep.subr.mxu0 0.0
      %361 = vmatpush1.msra.mxu0 0.0
      %362 = vmatprep.subr.mxu0 0.0
      %363 = vmatpush1.msra.mxu0 0.0
      %364 = vmatprep.subr.mxu0 0.0
      %365 = vmatpush1.msra.mxu0 0.0
      %366 = vmatprep.subr.mxu0 0.0
      %367 = vmatpush1.msra.mxu0 0.0
      %368 = vmatprep.subr.mxu0 0.0
      %369 = vmatpush1.msra.mxu0 0.0
      %370 = vmatprep.subr.mxu0 0.0
      %371 = vmatpush1.msra.mxu0 0.0
      %372 = vmatprep.subr.mxu0 0.0
      %373 = vmatpush1.msra.mxu0 0.0
      %374 = vmatprep.subr.mxu0 0.0
      %375 = vmatpush1.msra.mxu0 0.0
      %376 = vmatprep.subr.mxu0 0.0
      %377 = vmatpush1.msra.mxu0 0.0
      %378 = vmatprep.subr.mxu0 0.0
      %379 = vmatpush1.msra.mxu0 0.0
      %380 = vmatprep.subr.mxu0 0.0
      %381 = vmatpush1.msra.mxu0 0.0
      %382 = vmatprep.subr.mxu0 0.0
      %383 = vmatpush1.msra.mxu0 0.0
      %384 = vmatprep.subr.mxu0 0.0
      %385 = vmatpush1.msra.mxu0 0.0
      %386 = vmatprep.subr.mxu0 0.0
      %387 = vmatpush1.msra.mxu0 0.0
      %388 = vmatprep.subr.mxu0 0.0
      %389 = vmatpush1.msra.mxu0 0.0
      %390 = vmatprep.subr.mxu0 0.0
      %391 = vmatpush1.msra.mxu0 0.0
      %392 = vmatprep.subr.mxu0 0.0
      %393 = vmatpush1.msra.mxu0 0.0
      %394 = vmatprep.subr.mxu0 0.0
      %395 = vmatpush1.msra.mxu0 0.0
      %396 = vmatprep.subr.mxu0 0.0
      %397 = vmatpush1.msra.mxu0 0.0
      %398 = vmatprep.subr.mxu0 0.0
      %399 = vmatpush1.msra.mxu0 0.0
      %400 = vmatprep.subr.mxu0 0.0
      %401 = vmatpush1.msra.mxu0 0.0
      %402 = vmatprep.mubr.f32.mxu0 0.0
      %403 = vmatmul.mubr.f32.gmra.mrb[0].mxu0 %v239
      %v404 = vpop.f32.mrb[0].mxu0
      %v405 = vadd.f32 %v235, %v404
      %v406 = vpop.f32.mrb[0].mxu0
      %407 = vmatprep.mubr.f32.mxu0 0.0
      %408 = vmatmul.mubr.f32.gmra.mrb[0].mxu0 %v242
      %v409 = vpop.f32.mrb[0].mxu0
      %v410 = vadd.f32 %v235, %v409
      %v411 = vpop.f32.mrb[0].mxu0
      %412 = vmatprep.mubr.f32.mxu0 0.0
      %413 = vmatmul.mubr.f32.gmra.mrb[0].mxu0 %v245
      %v414 = vpop.f32.mrb[0].mxu0
      %v415 = vadd.f32 %v235, %v414
      %v416 = vpop.f32.mrb[0].mxu0
      %417 = vmatprep.mubr.f32.mxu0 0.0
      %418 = vmatmul.mubr.f32.gmra.mrb[0].mxu0 %v248
      %v419 = vpop.f32.mrb[0].mxu0
      %v420 = vadd.f32 %v235, %v419
      %v421 = vpop.f32.mrb[0].mxu0
      %422 = vmatprep.mubr.f32.mxu0 0.0
      %423 = vmatmul.mubr.f32.gmra.mrb[0].mxu0 %v251
      %v424 = vpop.f32.mrb[0].mxu0
      %v425 = vadd.f32 %v235, %v424
      %v426 = vpop.f32.mrb[0].mxu0
      %427 = vmatprep.mubr.f32.mxu0 0.0
      %428 = vmatmul.mubr.f32.gmra.mrb[0].mxu0 %v254
      %v429 = vpop.f32.mrb[0].mxu0
      %v430 = vadd.f32 %v235, %v429
      %v431 = vpop.f32.mrb[0].mxu0
      %432 = vmatprep.mubr.f32.mxu0 0.0
      %433 = vmatmul.mubr.f32.gmra.mrb[0].mxu0 %v257
      %v434 = vpop.f32.mrb[0].mxu0
      %v435 = vadd.f32 %v235, %v434
      %v436 = vpop.f32.mrb[0].mxu0
      %437 = vmatprep.mubr.f32.mxu0 0.0
      %438 = vmatmul.mubr.f32.gmra.mrb[0].mxu0 %v260
      %v439 = vpop.f32.mrb[0].mxu0
      %v440 = vadd.f32 %v235, %v439
      %v441 = vpop.f32.mrb[0].mxu0
      %442 = vmatprep.mubr.f32.mxu0 0.0
      %443 = vmatmul.mubr.f32.gmra.mrb[0].mxu0 %v263
      %v444 = vpop.f32.mrb[0].mxu0
      %v445 = vadd.f32 %v235, %v444
      %v446 = vpop.f32.mrb[0].mxu0
      %447 = vmatprep.mubr.f32.mxu0 0.0
      %448 = vmatmul.mubr.f32.gmra.mrb[0].mxu0 %v266
      %v449 = vpop.f32.mrb[0].mxu0
      %v450 = vadd.f32 %v235, %v449
      %v451 = vpop.f32.mrb[0].mxu0
      %452 = vmatprep.mubr.f32.mxu0 0.0
      %453 = vmatmul.mubr.f32.gmra.mrb[0].mxu0 %v269
      %v454 = vpop.f32.mrb[0].mxu0
      %v455 = vadd.f32 %v235, %v454
      %v456 = vpop.f32.mrb[0].mxu0
      %457 = vmatprep.mubr.f32.mxu0 0.0
      %458 = vmatmul.mubr.f32.gmra.mrb[0].mxu0 %v272
      %v459 = vpop.f32.mrb[0].mxu0
      %v460 = vadd.f32 %v235, %v459
      %v461 = vpop.f32.mrb[0].mxu0
      %462 = vmatprep.mubr.f32.mxu0 0.0
      %463 = vmatmul.mubr.f32.gmra.mrb[0].mxu0 %v275
      %v464 = vpop.f32.mrb[0].mxu0
      %v465 = vadd.f32 %v235, %v464
      %v466 = vpop.f32.mrb[0].mxu0
      %467 = vmatprep.mubr.f32.mxu0 0.0
      %468 = vmatmul.mubr.f32.gmra.mrb[0].mxu0 %v278
      %v469 = vpop.f32.mrb[0].mxu0
      %v470 = vadd.f32 %v235, %v469
      %v471 = vpop.f32.mrb[0].mxu0
      %472 = vmatprep.mubr.f32.mxu0 0.0
      %473 = vmatmul.mubr.f32.gmra.mrb[0].mxu0 %v281
      %v474 = vpop.f32.mrb[0].mxu0
      %v475 = vadd.f32 %v235, %v474
      %v476 = vpop.f32.mrb[0].mxu0
      %477 = vmatprep.mubr.f32.mxu0 0.0
      %478 = vmatmul.mubr.f32.gmra.mrb[0].mxu0 %v284
      %v479 = vpop.f32.mrb[0].mxu0
      %v480 = vadd.f32 %v235, %v479
      %v481 = vpop.f32.mrb[0].mxu0
      %482 = vmatprep.mubr.f32.mxu0 0.0
      %483 = vmatmul.mubr.f32.gmra.mrb[0].mxu0 %v287
      %v484 = vpop.f32.mrb[0].mxu0
      %v485 = vadd.f32 %v235, %v484
      %v486 = vpop.f32.mrb[0].mxu0
      %487 = vmatprep.mubr.f32.mxu0 0.0
      %488 = vmatmul.mubr.f32.gmra.mrb[0].mxu0 %v290
      %v489 = vpop.f32.mrb[0].mxu0
      %v490 = vadd.f32 %v235, %v489
      %v491 = vpop.f32.mrb[0].mxu0
      %492 = vmatprep.mubr.f32.mxu0 0.0
      %493 = vmatmul.mubr.f32.gmra.mrb[0].mxu0 %v293
      %v494 = vpop.f32.mrb[0].mxu0
      %v495 = vadd.f32 %v235, %v494
      %v496 = vpop.f32.mrb[0].mxu0
      %497 = vmatprep.mubr.f32.mxu0 0.0
      %498 = vmatmul.mubr.f32.gmra.mrb[0].mxu0 %v296
      %v499 = vpop.f32.mrb[0].mxu0
      %v500 = vadd.f32 %v235, %v499
      %v501 = vpop.f32.mrb[0].mxu0
      %502 = vmatprep.mubr.f32.mxu0 0.0
      %503 = vmatmul.mubr.f32.gmra.mrb[0].mxu0 %v299
      %v504 = vpop.f32.mrb[0].mxu0
      %v505 = vadd.f32 %v235, %v504
      %v506 = vpop.f32.mrb[0].mxu0
      %507 = vmatprep.mubr.f32.mxu0 0.0
      %508 = vmatmul.mubr.f32.gmra.mrb[0].mxu0 %v302
      %v509 = vpop.f32.mrb[0].mxu0
      %v510 = vadd.f32 %v235, %v509
      %v511 = vpop.f32.mrb[0].mxu0
      %512 = vmatprep.mubr.f32.mxu0 0.0
      %513 = vmatmul.mubr.f32.gmra.mrb[0].mxu0 %v305
      %v514 = vpop.f32.mrb[0].mxu0
      %v515 = vadd.f32 %v235, %v514
      %v516 = vpop.f32.mrb[0].mxu0
      %517 = vmatprep.mubr.f32.mxu0 0.0
      %518 = vmatmul.mubr.f32.gmra.mrb[0].mxu0 %v308
      %v519 = vpop.f32.mrb[0].mxu0
      %v520 = vadd.f32 %v235, %v519
      %v521 = vpop.f32.mrb[0].mxu0
      %522 = vmatprep.mubr.f32.mxu0 0.0
      %523 = vmatmul.mubr.f32.gmra.mrb[0].mxu0 %v311
      %v524 = vpop.f32.mrb[0].mxu0
      %v525 = vadd.f32 %v235, %v524
      %v526 = vpop.f32.mrb[0].mxu0
      %527 = vmatprep.mubr.f32.mxu0 0.0
      %528 = vmatmul.mubr.f32.gmra.mrb[0].mxu0 %v314
      %v529 = vpop.f32.mrb[0].mxu0
      %v530 = vadd.f32 %v235, %v529
      %v531 = vpop.f32.mrb[0].mxu0
      %532 = vmatprep.mubr.f32.mxu0 0.0
      %533 = vmatmul.mubr.f32.gmra.mrb[0].mxu0 %v317
      %v534 = vpop.f32.mrb[0].mxu0
      %v535 = vadd.f32 %v235, %v534
      %v536 = vpop.f32.mrb[0].mxu0
      %537 = vmatprep.mubr.f32.mxu0 0.0
      %538 = vmatmul.mubr.f32.gmra.mrb[0].mxu0 %v320
      %v539 = vpop.f32.mrb[0].mxu0
      %v540 = vadd.f32 %v235, %v539
      %v541 = vpop.f32.mrb[0].mxu0
      %542 = vmatprep.mubr.f32.mxu0 0.0
      %543 = vmatmul.mubr.f32.gmra.mrb[0].mxu0 %v323
      %v544 = vpop.f32.mrb[0].mxu0
      %v545 = vadd.f32 %v235, %v544
      %v546 = vpop.f32.mrb[0].mxu0
      %547 = vmatprep.mubr.f32.mxu0 0.0
      %548 = vmatmul.mubr.f32.gmra.mrb[0].mxu0 %v326
      %v549 = vpop.f32.mrb[0].mxu0
      %v550 = vadd.f32 %v235, %v549
      %v551 = vpop.f32.mrb[0].mxu0
      %552 = vmatprep.mubr.f32.mxu0 0.0
      %553 = vmatmul.mubr.f32.gmra.mrb[0].mxu0 %v329
      %v554 = vpop.f32.mrb[0].mxu0
      %v555 = vadd.f32 %v235, %v554
      %v556 = vpop.f32.mrb[0].mxu0
      %557 = vmatprep.mubr.f32.mxu0 0.0
      %558 = vmatmul.mubr.f32.gmra.mrb[0].mxu0 %v332
      %v559 = vpop.f32.mrb[0].mxu0
      %v560 = vadd.f32 %v235, %v559
      %v561 = vpop.f32.mrb[0].mxu0
      %562 = vdwg.mxu0
      %vm563 = vcmp.ge.f32.partialorder %v405, 0.0
      %vm564 = vcmp.ge.f32.partialorder %v410, 0.0
      %vm565 = vcmp.ge.f32.partialorder %v415, 0.0
      %vm566 = vcmp.ge.f32.partialorder %v420, 0.0
      %vm567 = vcmp.ge.f32.partialorder %v425, 0.0
      %vm568 = vcmp.ge.f32.partialorder %v430, 0.0
      %vm569 = vcmp.ge.f32.partialorder %v435, 0.0
      %vm570 = vcmp.ge.f32.partialorder %v440, 0.0
      %vm571 = vcmp.ge.f32.partialorder %v445, 0.0
      %vm572 = vcmp.ge.f32.partialorder %v450, 0.0
      %vm573 = vcmp.ge.f32.partialorder %v455, 0.0
      %vm574 = vcmp.ge.f32.partialorder %v460, 0.0
      %vm575 = vcmp.ge.f32.partialorder %v465, 0.0
      %vm576 = vcmp.ge.f32.partialorder %v470, 0.0
      %vm577 = vcmp.ge.f32.partialorder %v475, 0.0
      %vm578 = vcmp.ge.f32.partialorder %v480, 0.0
      %vm579 = vcmp.ge.f32.partialorder %v485, 0.0
      %vm580 = vcmp.ge.f32.partialorder %v490, 0.0
      %vm581 = vcmp.ge.f32.partialorder %v495, 0.0
      %vm582 = vcmp.ge.f32.partialorder %v500, 0.0
      %vm583 = vcmp.ge.f32.partialorder %v505, 0.0
      %vm584 = vcmp.ge.f32.partialorder %v510, 0.0
      %vm585 = vcmp.ge.f32.partialorder %v515, 0.0
      %vm586 = vcmp.ge.f32.partialorder %v520, 0.0
      %vm587 = vcmp.ge.f32.partialorder %v525, 0.0
      %vm588 = vcmp.ge.f32.partialorder %v530, 0.0
      %vm589 = vcmp.ge.f32.partialorder %v535, 0.0
      %vm590 = vcmp.ge.f32.partialorder %v540, 0.0
      %vm591 = vcmp.ge.f32.partialorder %v545, 0.0
      %vm592 = vcmp.ge.f32.partialorder %v550, 0.0
      %vm593 = vcmp.ge.f32.partialorder %v555, 0.0
      %vm594 = vcmp.ge.f32.partialorder %v560, 0.0
      %v595 = vmul.f32 %v405, 0.1
      %v596 = vmul.f32 %v410, 0.1
      %v597 = vmul.f32 %v415, 0.1
      %v598 = vmul.f32 %v420, 0.1
      %v599 = vmul.f32 %v425, 0.1
      %v600 = vmul.f32 %v430, 0.1
      %v601 = vmul.f32 %v435, 0.1
      %v602 = vmul.f32 %v440, 0.1
      %v603 = vmul.f32 %v445, 0.1
      %v604 = vmul.f32 %v450, 0.1
      %v605 = vmul.f32 %v455, 0.1
      %v606 = vmul.f32 %v460, 0.1
      %v607 = vmul.f32 %v465, 0.1
      %v608 = vmul.f32 %v470, 0.1
      %v609 = vmul.f32 %v475, 0.1
      %v610 = vmul.f32 %v480, 0.1
      %v611 = vmul.f32 %v485, 0.1
      %v612 = vmul.f32 %v490, 0.1
      %v613 = vmul.f32 %v495, 0.1
      %v614 = vmul.f32 %v500, 0.1
      %v615 = vmul.f32 %v505, 0.1
      %v616 = vmul.f32 %v510, 0.1
      %v617 = vmul.f32 %v515, 0.1
      %v618 = vmul.f32 %v520, 0.1
      %v619 = vmul.f32 %v525, 0.1
      %v620 = vmul.f32 %v530, 0.1
      %v621 = vmul.f32 %v535, 0.1
      %v622 = vmul.f32 %v540, 0.1
      %v623 = vmul.f32 %v545, 0.1
      %v624 = vmul.f32 %v550, 0.1
      %v625 = vmul.f32 %v555, 0.1
      %v626 = vmul.f32 %v560, 0.1
      %v627 = vsel %vm563, %v405, %v595
      %v628 = vsel %vm564, %v410, %v596
      %v629 = vsel %vm565, %v415, %v597
      %v630 = vsel %vm566, %v420, %v598
      %v631 = vsel %vm567, %v425, %v599
      %v632 = vsel %vm568, %v430, %v600
      %v633 = vsel %vm569, %v435, %v601
      %v634 = vsel %vm570, %v440, %v602
      %v635 = vsel %vm571, %v445, %v603
      %v636 = vsel %vm572, %v450, %v604
      %v637 = vsel %vm573, %v455, %v605
      %v638 = vsel %vm574, %v460, %v606
      %v639 = vsel %vm575, %v465, %v607
      %v640 = vsel %vm576, %v470, %v608
      %v641 = vsel %vm577, %v475, %v609
      %v642 = vsel %vm578, %v480, %v610
      %v643 = vsel %vm579, %v485, %v611
      %v644 = vsel %vm580, %v490, %v612
      %v645 = vsel %vm581, %v495, %v613
      %v646 = vsel %vm582, %v500, %v614
      %v647 = vsel %vm583, %v505, %v615
      %v648 = vsel %vm584, %v510, %v616
      %v649 = vsel %vm585, %v515, %v617
      %v650 = vsel %vm586, %v520, %v618
      %v651 = vsel %vm587, %v525, %v619
      %v652 = vsel %vm588, %v530, %v620
      %v653 = vsel %vm589, %v535, %v621
      %v654 = vsel %vm590, %v540, %v622
      %v655 = vsel %vm591, %v545, %v623
      %v656 = vsel %vm592, %v550, %v624
      %v657 = vsel %vm593, %v555, %v625
      %v658 = vsel %vm594, %v560, %v626
      %vm659 = vcmask 130048
      %660 = vst.msk [vmem:[%s192] sm:$0xff] %vm659, %v627
      %661 = vst.msk [vmem:[%s192 + $0x8] sm:$0xff] %vm659, %v628
      %662 = vst.msk [vmem:[%s192 + $0x10] sm:$0xff] %vm659, %v629
      %663 = vst.msk [vmem:[%s192 + $0x18] sm:$0xff] %vm659, %v630
      %664 = vst.msk [vmem:[%s192 + $0x20] sm:$0xff] %vm659, %v631
      %665 = vst.msk [vmem:[%s192 + $0x28] sm:$0xff] %vm659, %v632
      %666 = vst.msk [vmem:[%s192 + $0x30] sm:$0xff] %vm659, %v633
      %667 = vst.msk [vmem:[%s192 + $0x38] sm:$0xff] %vm659, %v634
      %668 = vst.msk [vmem:[%s192 + $0x40] sm:$0xff] %vm659, %v635
      %669 = vst.msk [vmem:[%s192 + $0x48] sm:$0xff] %vm659, %v636
      %670 = vst.msk [vmem:[%s192 + $0x50] sm:$0xff] %vm659, %v637
      %671 = vst.msk [vmem:[%s192 + $0x58] sm:$0xff] %vm659, %v638
      %672 = vst.msk [vmem:[%s192 + $0x60] sm:$0xff] %vm659, %v639
      %673 = vst.msk [vmem:[%s192 + $0x68] sm:$0xff] %vm659, %v640
      %674 = vst.msk [vmem:[%s192 + $0x70] sm:$0xff] %vm659, %v641
      %675 = vst.msk [vmem:[%s192 + $0x78] sm:$0xff] %vm659, %v642
      %676 = vst.msk [vmem:[%s192 + $0x80] sm:$0xff] %vm659, %v643
      %677 = vst.msk [vmem:[%s192 + $0x88] sm:$0xff] %vm659, %v644
      %678 = vst.msk [vmem:[%s192 + $0x90] sm:$0xff] %vm659, %v645
      %679 = vst.msk [vmem:[%s192 + $0x98] sm:$0xff] %vm659, %v646
      %680 = vst.msk [vmem:[%s192 + $0xa0] sm:$0xff] %vm659, %v647
      %681 = vst.msk [vmem:[%s192 + $0xa8] sm:$0xff] %vm659, %v648
      %682 = vst.msk [vmem:[%s192 + $0xb0] sm:$0xff] %vm659, %v649
      %683 = vst.msk [vmem:[%s192 + $0xb8] sm:$0xff] %vm659, %v650
      %684 = vst.msk [vmem:[%s192 + $0xc0] sm:$0xff] %vm659, %v651
      %685 = vst.msk [vmem:[%s192 + $0xc8] sm:$0xff] %vm659, %v652
      %686 = vst.msk [vmem:[%s192 + $0xd0] sm:$0xff] %vm659, %v653
      %687 = vst.msk [vmem:[%s192 + $0xd8] sm:$0xff] %vm659, %v654
      %688 = vst.msk [vmem:[%s192 + $0xe0] sm:$0xff] %vm659, %v655
      %689 = vst.msk [vmem:[%s192 + $0xe8] sm:$0xff] %vm659, %v656
      %690 = vst.msk [vmem:[%s192 + $0xf0] sm:$0xff] %vm659, %v657
      %691 = vst.msk [vmem:[%s192 + $0xf8] sm:$0xff] %vm659, %v658
      %s692 = smul.u32 32, %s19
      %p693 = scmp.lt.s32.totalorder %s18, 1
      %s694 = scalar_select %p693, %s18, 1
      %p695 = scmp.lt.s32.totalorder %s692, 127
      %s696 = scalar_select %p695, %s692, 127
      %s697 = smul.addr %s694, 128
      %s698 = sadd.s32 %s696, %s697
      %s699 = smul.addr %s698, 8
      %s700 = scalar_lea.vmem %s3, %s699
      // Predicated region
      $region33: #{tpu_custom_call.1} parent=31 // pred_check
        %p701 = pneg %p114
      $region34: #{tpu_custom_call.1} parent=31 // pred_check_branch
        %703 = sbr.rel (%p701) target = $region36
      $region35: #{tpu_custom_call.1} parent=31 // pred_region
        %s704 = smul.u32 32, %s19
      $region36: #{tpu_custom_call.1} parent=31 // pred_fallthru
        _
    $region32: #{tpu_custom_call.1} parent=5 // pred_fallthru
      _
    %p705 = scmp.le.s32.totalorder 2, %s9
    // Predicated region
    $region37: #{tpu_custom_call.1} parent=5 // pred_check
      %p706 = pneg %p705
    $region38: #{tpu_custom_call.1} parent=5 // pred_check_branch
      %708 = sbr.rel (%p706) target = $region40
    $region39: #{tpu_custom_call.1} parent=5 // pred_region
      %s709 = ssub.s32 %s9, 2
      // Predicated region
      $region41: #{tpu_custom_call.1} parent=39 // pred_check
        %p710 = pneg %p120
      $region42: #{tpu_custom_call.1} parent=39 // pred_check_branch
        %712 = sbr.rel (%p710) target = $region44
      $region43: #{tpu_custom_call.1} parent=39 // pred_region
        %s713 = smul.u32 32, %s21
        %p714 = scmp.lt.s32.totalorder %s20, 1
        %s715 = scalar_select %p714, %s20, 1
        %p716 = scmp.lt.s32.totalorder %s713, 127
        %s717 = scalar_select %p716, %s713, 127
        %s718 = smul.addr %s715, 128
        %s719 = sadd.s32 %s717, %s718
        %s720 = smul.addr %s719, 8
        %s721 = scalar_lea.vmem %s3, %s720
      $region44: #{tpu_custom_call.1} parent=39 // pred_fallthru
        _
    $region40: #{tpu_custom_call.1} parent=5 // pred_fallthru
      _
  $region6: #{tpu_custom_call.1} parent=0 // loop_footer
    %s13 = sadd.s32 1, %s9
  $region7: #{tpu_custom_call.1} parent=0 // loop_footer_branch
    %8 = sbr.rel target = $region3
  $region8: #{tpu_custom_call.1} parent=0 // loop_exit
    _

</llo_original>
